<compile_context>
chip_gen: v7x
topology: tpu7x:2x2x1
jax: 0.10.0
libtpu: 0.0.40
codegen_flags: <defaults>
</compile_context>

<pallas_src>
import jax
import jax.numpy as jnp
from jax import lax
from jax.experimental import pallas as pl
from jax.experimental.pallas import tpu as pltpu

_CK = 32                  # channel chunk (sublanes) streamed per inner-loop step
_MIB = 1024 * 1024


def cbam_kernel(x_ref, w1t_ref, b1_ref, w2t_ref, b2_ref, cw_ref, cb_ref,
                o_ref, sc_chunks_ref):
    """One grid step processes `bt` batch elements.

    x_ref        : (bt, C, S)            VMEM (f32 or bf16 storage)
    w1t_ref      : (C, hid)              VMEM  Linear(C, hid).weight^T
    b1_ref       : (1, hid)              VMEM
    w2t_ref      : (hid, C)              VMEM  Linear(hid, C).weight^T
    b2_ref       : (1, C)                VMEM
    cw_ref       : (2,)                  SMEM  1x1 Conv2d(2,1) weight [w_max, w_avg]
    cb_ref       : (1,)                  SMEM  Conv2d bias
    o_ref        : (bt, S) or (bt, 1, S) VMEM
    sc_chunks_ref: (max(C//_CK,1), bt, _CK) VMEM scratch -- staged scale chunks
    """
    bt, C, S = x_ref.shape
    n_full = C // _CK
    rem = C - n_full * _CK

    # ---- Channel attention: global max / mean pooling over the spatial axis ----
    max_c = jnp.max(x_ref[...], axis=2).astype(jnp.float32)          # (bt, C)
    sum_c = jnp.sum(x_ref[...].astype(jnp.float32), axis=2)          # (bt, C)
    pooled = jnp.concatenate([max_c, sum_c * (1.0 / S)], axis=0)     # (2*bt, C)

    # Shared MLP; both pooling branches fused into one pair of MXU matmuls.
    h = jnp.dot(pooled, w1t_ref[...], preferred_element_type=jnp.float32)
    h = jnp.maximum(h + b1_ref[...], 0.0)                            # (2*bt, hid)
    mlp = jnp.dot(h, w2t_ref[...], preferred_element_type=jnp.float32) + b2_ref[...]
    scale = jax.nn.sigmoid(mlp[:bt] + mlp[bt:])                      # (bt, C)

    # Stage the per-chunk scale columns so the streaming loop below only needs a
    # dynamic *leading-axis* index (static lane slices here, no dynamic lane slicing).
    for k in range(n_full):
        sc_chunks_ref[k] = scale[:, k * _CK:(k + 1) * _CK]

    # ---- Spatial attention: stream refined = x * scale over channel chunks.
    # Only (bt, S) running-max / running-sum accumulators stay live; the full
    # (bt, C, S) refined tensor is never materialized.
    run_max0 = jnp.full((bt, S), -jnp.inf, dtype=jnp.float32)
    run_sum0 = jnp.zeros((bt, S), dtype=jnp.float32)

    def body(i, carry):
        run_max, run_sum = carry
        c0 = pl.multiple_of(i * _CK, _CK)
        chunk = x_ref[:, pl.ds(c0, _CK), :].astype(jnp.float32)      # (bt, _CK, S)
        r = chunk * sc_chunks_ref[i][:, :, None]
        return (jnp.maximum(run_max, jnp.max(r, axis=1)),
                run_sum + jnp.sum(r, axis=1))

    if n_full > 0:
        run_max, run_sum = lax.fori_loop(0, n_full, body, (run_max0, run_sum0))
    else:
        run_max, run_sum = run_max0, run_sum0

    if rem > 0:                                                      # static tail chunk
        c0 = n_full * _CK
        chunk = x_ref[:, c0:C, :].astype(jnp.float32)                # (bt, rem, S)
        r = chunk * scale[:, c0:C][:, :, None]
        run_max = jnp.maximum(run_max, jnp.max(r, axis=1))
        run_sum = run_sum + jnp.sum(r, axis=1)

    # 1x1 Conv2d(2 -> 1) over [max, avg] == scalar FMA with SMEM weights.
    conv = cw_ref[0] * run_max + cw_ref[1] * (run_sum * (1.0 / C)) + cb_ref[0]
    out = jax.nn.sigmoid(conv)                                       # (bt, S)
    if len(o_ref.shape) == 3:            # (bt, 1, S) fallback layout
        o_ref[...] = out[:, None, :].astype(o_ref.dtype)
    else:                                # (bt, S) lane/sublane-dense store
        o_ref[...] = out.astype(o_ref.dtype)


def _plan_tiles(B, C, S, hid, in_itemsize):
    """VMEM-budget-aware batch-tile / output-layout / vmem-limit selection."""
    try:
        info = pltpu.get_tpu_info()
        vmem_cap = int(getattr(info, "vmem_capacity_bytes", 0)) or None
    except Exception:
        vmem_cap = None
    if vmem_cap is None:
        vmem_cap = 64 * _MIB             # conservative fallback (v7x-sized)
    vmem_cap = max(vmem_cap, 64 * _MIB)

    small_vmem = vmem_cap <= 64 * _MIB   # v7x-like: 64 MiB/TC and 2 TensorCores
    if small_vmem:
        vmem_limit = min(vmem_cap - 12 * _MIB, 48 * _MIB)
        block_budget = 10 * _MIB
        prefer_multi_step = True         # grid >= 2 so "parallel" spans both TCs
    else:                                # v5e / v6e: 128 MiB VMEM, single TC
        vmem_limit = 96 * _MIB
        block_budget = 24 * _MIB
        prefer_multi_step = False        # one maximal block beats extra grid steps

    per_batch_x = C * S * in_itemsize
    n_full = C // _CK
    ck_eff = _CK if n_full > 0 else C

    def step_bytes(bt):
        x_blk = 2 * bt * per_batch_x                       # double-buffered input
        out_blk = 2 * bt * S * 4                           # double-buffered output
        w = 2 * (C * hid + hid + hid * C + C) * 4          # (tiny) weight blocks
        sc_scr = max(n_full, 1) * ((bt + 7) // 8) * 8 * 128 * 4
        live = (2 * bt * ck_eff * S + 4 * bt * S + 6 * bt * C) * 4
        return x_blk + out_blk + w + sc_scr + live

    bt = max(1, min(B, block_budget // max(per_batch_x, 1)))
    while bt > 1 and step_bytes(bt) > int(vmem_limit * 0.8):
        bt = max(1, bt // 2)

    if step_bytes(bt) > int(vmem_limit * 0.8):
        # Even a single batch row blows the budget: raise the limit toward the
        # physical capacity, otherwise fail loudly instead of mis-compiling.
        needed = int(step_bytes(1) / 0.8) + _MIB
        hard_cap = vmem_cap - 8 * _MIB
        if needed <= hard_cap:
            vmem_limit = needed
        else:
            # TODO(synk): add spatial (S) tiling for single rows that exceed VMEM.
            raise ValueError(
                "CBAM Pallas kernel: one batch row "
                f"(C*S*{in_itemsize} = {per_batch_x} bytes) does not fit the VMEM "
                f"budget ({hard_cap} bytes); spatial tiling is not implemented.")

    if prefer_multi_step and B >= 2:
        bt = min(bt, -(-B // 2))         # grid length >= 2 -> both TensorCores busy

    # (8, 128) layout rule for the dense 2-D output block: sublane dim must be a
    # multiple of 8 or cover the whole batch; otherwise fall back to (bt, 1, S).
    if bt == B or bt % 8 == 0:
        out_2d = True
    elif bt >= 8:
        bt = (bt // 8) * 8
        out_2d = True
    else:
        out_2d = False
    return bt, out_2d, int(vmem_limit)


def cbam_block(x, params, store_input_bf16=False):
    """x: (B, C, H, W) float32 (NCHW, matching the PyTorch module)."""
    w1, b1, w2, b2, cw, cb = params
    B, C, H, W = x.shape
    S = H * W
    hid = w1.shape[0]

    xs = x.reshape(B, C, S)
    if store_input_bf16:
        # Optional ~2x HBM-traffic reduction; MLP / accumulation stay f32 in-kernel.
        xs = xs.astype(jnp.bfloat16)

    # Layout plumbing done once on the host side of the kernel.
    w1t = jnp.asarray(w1.T, jnp.float32)              # (C, hid)
    b1r = jnp.asarray(b1.reshape(1, hid), jnp.float32)
    w2t = jnp.asarray(w2.T, jnp.float32)              # (hid, C)
    b2r = jnp.asarray(b2.reshape(1, C), jnp.float32)
    cwf = jnp.asarray(cw.reshape(2), jnp.float32)     # SMEM scalars
    cbf = jnp.asarray(cb.reshape(1), jnp.float32)

    bt, out_2d, vmem_limit = _plan_tiles(B, C, S, hid, jnp.dtype(xs.dtype).itemsize)
    grid = (pl.cdiv(B, bt),)             # padded trailing batch rows are safe:
                                         # all reductions are per-row (per b, per c)
    n_full = C // _CK

    if out_2d:
        out_shape = jax.ShapeDtypeStruct((B, S), jnp.float32)
        out_spec = pl.BlockSpec((bt, S), lambda b: (b, 0))
    else:
        out_shape = jax.ShapeDtypeStruct((B, 1, S), jnp.float32)
        out_spec = pl.BlockSpec((bt, 1, S), lambda b: (b, 0, 0))

    out = pl.pallas_call(
        cbam_kernel,
        out_shape=out_shape,
        grid_spec=pltpu.PrefetchScalarGridSpec(
            num_scalar_prefetch=0,
            grid=grid,
            in_specs=[
                pl.BlockSpec((bt, C, S), lambda b: (b, 0, 0)),        # x, bt batches/step
                pl.BlockSpec((C, hid), lambda b: (0, 0)),             # W1^T
                pl.BlockSpec((1, hid), lambda b: (0, 0)),             # b1
                pl.BlockSpec((hid, C), lambda b: (0, 0)),             # W2^T
                pl.BlockSpec((1, C), lambda b: (0, 0)),               # b2
                pl.BlockSpec(memory_space=pltpu.MemorySpace.SMEM),    # conv weight (2,)
                pl.BlockSpec(memory_space=pltpu.MemorySpace.SMEM),    # conv bias (1,)
            ],
            out_specs=out_spec,
            scratch_shapes=[pltpu.VMEM((max(n_full, 1), bt, _CK), jnp.float32)],
        ),
        compiler_params=pltpu.CompilerParams(
            dimension_semantics=("parallel",),
            vmem_limit_bytes=int(vmem_limit),
        ),
    )(xs, w1t, b1r, w2t, b2r, cwf, cbf)
    return out.reshape(B, 1, H, W)


def ref_cbam(x, params):
    """Pure-JAX reference mirroring the PyTorch forward."""
    w1, b1, w2, b2, cw, cb = params
    B, C, H, W = x.shape
    xs = x.reshape(B, C, H * W)
    mx = xs.max(axis=2)                               # AdaptiveMaxPool2d(1) -> (B, C)
    av = xs.mean(axis=2)                              # AdaptiveAvgPool2d(1) -> (B, C)

    def mlp(v):                                       # (B, C)
        h = jnp.maximum(v @ w1.T + b1[:, 0], 0.0)
        return h @ w2.T + b2[:, 0]

    scale = jax.nn.sigmoid(mlp(mx) + mlp(av))         # (B, C)
    refined = xs * scale[:, :, None]                  # residual * ca
    mx_s = refined.max(axis=1)                        # (B, S)
    av_s = refined.mean(axis=1)                       # (B, S)
    conv = cw[0, 0] * mx_s + cw[0, 1] * av_s + cb[0, 0]
    return jax.nn.sigmoid(conv).reshape(B, 1, H, W)


def init_params(channel, reduction, key):
    hid = channel // reduction
    assert hid >= 1, "channel must be >= reduction"
    k1, k2, k3, k4, k5, k6 = jax.random.split(key, 6)
    # Deterministic synthetic params (shapes follow the PyTorch module's __init__).
    w1 = jax.random.normal(k1, (hid, channel), jnp.float32) * 0.2    # Linear(C, C//r).weight
    b1 = jax.random.normal(k2, (hid, 1), jnp.float32) * 0.1          # Linear(C, C//r).bias
    w2 = jax.random.normal(k3, (channel, hid), jnp.float32) * 0.2    # Linear(C//r, C).weight
    b2 = jax.random.normal(k4, (channel, 1), jnp.float32) * 0.1      # Linear(C//r, C).bias
    cw = jax.random.normal(k5, (1, 2), jnp.float32) * 0.5            # Conv2d(2,1,1).weight -> (1,2)
    cb = jax.random.normal(k6, (1, 1), jnp.float32) * 0.1            # Conv2d(2,1,1).bias
    return (w1, b1, w2, b2, cw, cb)


def _run_case(B, C, H, W, reduction, key):
    kx, kp = jax.random.split(key)
    x = jax.random.normal(kx, (B, C, H, W), jnp.float32)
    params = init_params(C, reduction, kp)
    out = jax.block_until_ready(cbam_block(x, params))
    ref = jax.block_until_ready(ref_cbam(x, params))
    assert out.shape == (B, 1, H, W), out.shape
    err = float(jnp.max(jnp.abs(out - ref)))
    assert jnp.allclose(out, ref, atol=1e-5, rtol=1e-5), err


if __name__ == "__main__":
    key = jax.random.PRNGKey(0)
    k1, k2 = jax.random.split(key)
    _run_case(2, 32, 16, 16, 16, k1)   # canonical shape: C == one full channel chunk
    _run_case(3, 40, 7, 9, 8, k2)      # ragged shape: chunk tail, odd B/S, pl.cdiv grid
    print("KERNEL_OK")
</pallas_src>

<mosaic_0001>
module attributes {stable_mosaic.version = 11 : i64} {
  func.func @cbam_kernel(%arg0: i32, %arg1: memref<1x32x256xf32, #tpu.memory_space<vmem>>, %arg2: memref<32x2xf32, #tpu.memory_space<vmem>>, %arg3: memref<1x2xf32, #tpu.memory_space<vmem>>, %arg4: memref<2x32xf32, #tpu.memory_space<vmem>>, %arg5: memref<1x32xf32, #tpu.memory_space<vmem>>, %arg6: memref<2xf32, #tpu.memory_space<smem>>, %arg7: memref<1xf32, #tpu.memory_space<smem>>, %arg8: memref<1x1x256xf32, #tpu.memory_space<vmem>>, %arg9: memref<1x1x32xf32, #tpu.memory_space<vmem>>) attributes {dimension_semantics = [#tpu.dimension_semantics<parallel>], iteration_bounds = array<i64: 2>, scalar_prefetch = 0 : i64, scratch_operands = 1 : i64, tpu.core_type = #tpu.core_type<tc>, window_params = [{transform_indices = @transform_0, window_bounds = array<i64: 1, 32, 256>}, {pipeline_mode = #tpu.pipeline_mode<synchronous>, transform_indices = @transform_1, window_bounds = array<i64: 32, 2>}, {pipeline_mode = #tpu.pipeline_mode<synchronous>, transform_indices = @transform_2, window_bounds = array<i64: 1, 2>}, {pipeline_mode = #tpu.pipeline_mode<synchronous>, transform_indices = @transform_3, window_bounds = array<i64: 2, 32>}, {pipeline_mode = #tpu.pipeline_mode<synchronous>, transform_indices = @transform_4, window_bounds = array<i64: 1, 32>}, {transform_indices = @transform_5, window_bounds = array<i64: 2>}, {transform_indices = @transform_6, window_bounds = array<i64: 1>}, {transform_indices = @transform_7, window_bounds = array<i64: 1, 1, 256>}]} {
    %c0 = arith.constant 0 : index
    %c0_0 = arith.constant 0 : index
    %c0_1 = arith.constant 0 : index
    %0 = vector.load %arg1[%c0, %c0_0, %c0_1] : memref<1x32x256xf32, #tpu.memory_space<vmem>>, vector<1x32x256xf32>
    %cst = arith.constant dense<0xFF800000> : vector<1x32xf32>
    %1 = vector.multi_reduction <maximumf>, %0, %cst [2] : vector<1x32x256xf32> to vector<1x32xf32>
    %c0_2 = arith.constant 0 : index
    %c0_3 = arith.constant 0 : index
    %c0_4 = arith.constant 0 : index
    %2 = vector.load %arg1[%c0_2, %c0_3, %c0_4] : memref<1x32x256xf32, #tpu.memory_space<vmem>>, vector<1x32x256xf32>
    %cst_5 = arith.constant dense<0.000000e+00> : vector<1x32xf32>
    %3 = vector.multi_reduction <add>, %2, %cst_5 [2] : vector<1x32x256xf32> to vector<1x32xf32>
    %cst_6 = arith.constant 3.906250e-03 : f32
    %4 = vector.broadcast %cst_6 : f32 to vector<1x32xf32>
    %5 = arith.mulf %3, %4 : vector<1x32xf32>
    %6 = tpu.concatenate %1, %5 in 0 : vector<1x32xf32>, vector<1x32xf32> -> vector<2x32xf32>
    %c0_7 = arith.constant 0 : index
    %c0_8 = arith.constant 0 : index
    %7 = vector.load %arg2[%c0_7, %c0_8] : memref<32x2xf32, #tpu.memory_space<vmem>>, vector<32x2xf32>
    %cst_9 = arith.constant dense<0.000000e+00> : vector<2x2xf32>
    %8 = tpu.matmul %6, %7, %cst_9 {dimension_numbers = #tpu.dot_dimension_numbers<[1], [0], [0], [1], [0, 0, 1, 1], [], []>} : vector<2x32xf32>, vector<32x2xf32>, vector<2x2xf32> -> vector<2x2xf32>
    %c0_10 = arith.constant 0 : index
    %c0_11 = arith.constant 0 : index
    %9 = vector.load %arg3[%c0_10, %c0_11] : memref<1x2xf32, #tpu.memory_space<vmem>>, vector<1x2xf32>
    %10 = vector.broadcast %9 : vector<1x2xf32> to vector<2x2xf32>
    %11 = arith.addf %8, %10 : vector<2x2xf32>
    %cst_12 = arith.constant 0.000000e+00 : f32
    %12 = vector.broadcast %cst_12 : f32 to vector<2x2xf32>
    %13 = arith.maximumf %11, %12 : vector<2x2xf32>
    %c0_13 = arith.constant 0 : index
    %c0_14 = arith.constant 0 : index
    %14 = vector.load %arg4[%c0_13, %c0_14] : memref<2x32xf32, #tpu.memory_space<vmem>>, vector<2x32xf32>
    %cst_15 = arith.constant dense<0.000000e+00> : vector<2x32xf32>
    %15 = tpu.matmul %13, %14, %cst_15 {dimension_numbers = #tpu.dot_dimension_numbers<[1], [0], [0], [1], [0, 0, 1, 1], [], []>} : vector<2x2xf32>, vector<2x32xf32>, vector<2x32xf32> -> vector<2x32xf32>
    %c0_16 = arith.constant 0 : index
    %c0_17 = arith.constant 0 : index
    %16 = vector.load %arg5[%c0_16, %c0_17] : memref<1x32xf32, #tpu.memory_space<vmem>>, vector<1x32xf32>
    %17 = vector.broadcast %16 : vector<1x32xf32> to vector<2x32xf32>
    %18 = arith.addf %15, %17 : vector<2x32xf32>
    %19 = vector.extract_strided_slice %18 {offsets = [0, 0], sizes = [1, 32], strides = [1, 1]} : vector<2x32xf32> to vector<1x32xf32>
    %20 = vector.extract_strided_slice %18 {offsets = [1, 0], sizes = [1, 32], strides = [1, 1]} : vector<2x32xf32> to vector<1x32xf32>
    %21 = arith.addf %19, %20 : vector<1x32xf32>
    %22 = arith.negf %21 : vector<1x32xf32>
    %23 = math.exp %22 : vector<1x32xf32>
    %cst_18 = arith.constant 1.000000e+00 : f32
    %24 = vector.broadcast %cst_18 : f32 to vector<1x32xf32>
    %25 = arith.addf %24, %23 : vector<1x32xf32>
    %26 = arith.divf %24, %25 : vector<1x32xf32>
    %c0_19 = arith.constant 0 : index
    %c0_20 = arith.constant 0 : index
    %c0_21 = arith.constant 0 : index
    %27 = vector.load %arg9[%c0_19, %c0_20, %c0_21] : memref<1x1x32xf32, #tpu.memory_space<vmem>>, vector<1x1x32xf32>
    %28 = vector.shape_cast %27 : vector<1x1x32xf32> to vector<1x32xf32>
    %29 = vector.shape_cast %26 : vector<1x32xf32> to vector<1x1x32xf32>
    tpu.vector_store %arg9[%c0_19, %c0_20, %c0_21], %29 {strides = array<i32>} : memref<1x1x32xf32, #tpu.memory_space<vmem>>, vector<1x1x32xf32>,
    %cst_22 = arith.constant 0xFF800000 : f32
    %30 = vector.broadcast %cst_22 : f32 to vector<1x256xf32>
    %cst_23 = arith.constant 0.000000e+00 : f32
    %31 = vector.broadcast %cst_23 : f32 to vector<1x256xf32>
    %c0_i32 = arith.constant 0 : i32
    %c32_i32 = arith.constant 32 : i32
    %32 = arith.muli %c0_i32, %c32_i32 : i32
    %33 = tpu.assume_multiple %32, 32 : i32
    %c0_24 = arith.constant 0 : index
    %34 = arith.index_cast %33 : i32 to index
    %c0_25 = arith.constant 0 : index
    %35 = vector.load %arg1[%c0_24, %34, %c0_25] : memref<1x32x256xf32, #tpu.memory_space<vmem>>, vector<1x32x256xf32>
    %36 = arith.index_cast %c0_i32 : i32 to index
    %c0_26 = arith.constant 0 : index
    %c0_27 = arith.constant 0 : index
    %37 = vector.load %arg9[%36, %c0_26, %c0_27] : memref<1x1x32xf32, #tpu.memory_space<vmem>>, vector<1x1x32xf32>
    %38 = vector.shape_cast %37 : vector<1x1x32xf32> to vector<1x32xf32>
    %39 = vector.shape_cast %38 : vector<1x32xf32> to vector<1x32x1xf32>
    %40 = vector.broadcast %39 : vector<1x32x1xf32> to vector<1x32x256xf32>
    %41 = arith.mulf %35, %40 : vector<1x32x256xf32>
    %cst_28 = arith.constant dense<0xFF800000> : vector<1x256xf32>
    %42 = vector.multi_reduction <maximumf>, %41, %cst_28 [1] : vector<1x32x256xf32> to vector<1x256xf32>
    %43 = arith.maximumf %30, %42 : vector<1x256xf32>
    %cst_29 = arith.constant dense<0.000000e+00> : vector<1x256xf32>
    %44 = vector.multi_reduction <add>, %41, %cst_29 [1] : vector<1x32x256xf32> to vector<1x256xf32>
    %45 = arith.addf %31, %44 : vector<1x256xf32>
    %c1_i32 = arith.constant 1 : i32
    %c0_30 = arith.constant 0 : index
    %46 = memref.load %arg6[%c0_30] : memref<2xf32, #tpu.memory_space<smem>>
    %47 = vector.broadcast %46 : f32 to vector<1x256xf32>
    %48 = arith.mulf %47, %43 : vector<1x256xf32>
    %c1 = arith.constant 1 : index
    %49 = memref.load %arg6[%c1] : memref<2xf32, #tpu.memory_space<smem>>
    %cst_31 = arith.constant 3.125000e-02 : f32
    %50 = vector.broadcast %cst_31 : f32 to vector<1x256xf32>
    %51 = arith.mulf %45, %50 : vector<1x256xf32>
    %52 = vector.broadcast %49 : f32 to vector<1x256xf32>
    %53 = arith.mulf %52, %51 : vector<1x256xf32>
    %54 = arith.addf %48, %53 : vector<1x256xf32>
    %c0_32 = arith.constant 0 : index
    %55 = memref.load %arg7[%c0_32] : memref<1xf32, #tpu.memory_space<smem>>
    %56 = vector.broadcast %55 : f32 to vector<1x256xf32>
    %57 = arith.addf %54, %56 : vector<1x256xf32>
    %58 = arith.negf %57 : vector<1x256xf32>
    %59 = math.exp %58 : vector<1x256xf32>
    %cst_33 = arith.constant 1.000000e+00 : f32
    %60 = vector.broadcast %cst_33 : f32 to vector<1x256xf32>
    %61 = arith.addf %60, %59 : vector<1x256xf32>
    %62 = arith.divf %60, %61 : vector<1x256xf32>
    %63 = vector.shape_cast %62 : vector<1x256xf32> to vector<1x1x256xf32>
    %c0_34 = arith.constant 0 : index
    %c0_35 = arith.constant 0 : index
    %c0_36 = arith.constant 0 : index
    %64 = vector.load %arg8[%c0_34, %c0_35, %c0_36] : memref<1x1x256xf32, #tpu.memory_space<vmem>>, vector<1x1x256xf32>
    tpu.vector_store %arg8[%c0_34, %c0_35, %c0_36], %63 {strides = array<i32>} : memref<1x1x256xf32, #tpu.memory_space<vmem>>, vector<1x1x256xf32>,
    return
  }
  func.func @transform_0(%arg0: i32) -> (i32, i32, i32) {
    %c0_i32 = arith.constant 0 : i32
    %c0_i32_0 = arith.constant 0 : i32
    %c0_i32_1 = arith.constant 0 : i32
    return %arg0, %c0_i32, %c0_i32_0 : i32, i32, i32
  }
  func.func @transform_1(%arg0: i32) -> (i32, i32) {
    %c0_i32 = arith.constant 0 : i32
    %c0_i32_0 = arith.constant 0 : i32
    %c0_i32_1 = arith.constant 0 : i32
    return %c0_i32, %c0_i32_0 : i32, i32
  }
  func.func @transform_2(%arg0: i32) -> (i32, i32) {
    %c0_i32 = arith.constant 0 : i32
    %c0_i32_0 = arith.constant 0 : i32
    %c0_i32_1 = arith.constant 0 : i32
    return %c0_i32, %c0_i32_0 : i32, i32
  }
  func.func @transform_3(%arg0: i32) -> (i32, i32) {
    %c0_i32 = arith.constant 0 : i32
    %c0_i32_0 = arith.constant 0 : i32
    %c0_i32_1 = arith.constant 0 : i32
    return %c0_i32, %c0_i32_0 : i32, i32
  }
  func.func @transform_4(%arg0: i32) -> (i32, i32) {
    %c0_i32 = arith.constant 0 : i32
    %c0_i32_0 = arith.constant 0 : i32
    %c0_i32_1 = arith.constant 0 : i32
    return %c0_i32, %c0_i32_0 : i32, i32
  }
  func.func @transform_5(%arg0: i32) -> i32 {
    %c0_i32 = arith.constant 0 : i32
    %c0_i32_0 = arith.constant 0 : i32
    return %c0_i32 : i32
  }
  func.func @transform_6(%arg0: i32) -> i32 {
    %c0_i32 = arith.constant 0 : i32
    %c0_i32_0 = arith.constant 0 : i32
    return %c0_i32 : i32
  }
  func.func @transform_7(%arg0: i32) -> (i32, i32, i32) {
    %c0_i32 = arith.constant 0 : i32
    %c0_i32_0 = arith.constant 0 : i32
    %c0_i32_1 = arith.constant 0 : i32
    return %arg0, %c0_i32, %c0_i32_0 : i32, i32, i32
  }
}

</mosaic_0001>

<llo_original>
// kernel: tpu_custom_call.1
$region0: #{tpu_custom_call.1}
  #allocation0 [shape = 'u32[]', space=smem, size = 0x4, offset = 0x4, fixed_abs, tag = 'smem constant byte address 0x4 - core index']
  #allocation1 [shape = 'u32[144,128]{1,0:T(1,128)}', space=vmem, size = 0x12000, scoped, tag = 'internal scratch']
  #allocation2 [shape = 'f32[1,1,32]{2,1,0:T(1,128)}', space=vmem, size = 0x200, scoped, tag = 'scratch operand']
  #allocation3 [shape = 'f32[1]{0:T(128)S(6)}', space=smem, size = 0x200, scoped, tag = 'scoped memory for tpu_custom_call.1']
  %s0 = inlined_call_operand.hbm [shape: f32[2,32,256], index: 0, kind: input, shape index: {}]
  %s1 = inlined_call_operand.vmem [shape: f32[32,2], index: 1, kind: input, shape index: {}]
  %s2 = inlined_call_operand.vmem [shape: f32[1,2], index: 2, kind: input, shape index: {}]
  %s3 = inlined_call_operand.vmem [shape: f32[2,32], index: 3, kind: input, shape index: {}]
  %s4 = inlined_call_operand.vmem [shape: f32[1,32], index: 4, kind: input, shape index: {}]
  %s5 = inlined_call_operand.vmem [shape: f32[2], index: 5, kind: input, shape index: {}]
  %s6 = inlined_call_operand.<no memory space> [shape: f32[1], index: 6, kind: input, shape index: {}]
  %s7 = inlined_call_operand.hbm [shape: f32[2,1,256], index: 7, kind: output, shape index: {}]
  %s8 = sld [smem:[#allocation0]]
  $region69: #{tpu_custom_call.1} parent=0
    _
  %s10 = ssub.s32 1, %s8
  %s11 = scalar_select 0, %s10, %s8
  %12 = sst [smem:[#allocation3]] %s6
  $region1: #{tpu_custom_call.1} parent=0
    #allocation4 [shape = 'u8[65536]{0}', space=vmem, size = 0x10000, scoped, tag = 'input window, operand 0']
    #allocation5 [shape = 's32[2]{0}', space=sflag, size = 0x8, scoped, tag = 'scoped memory for tpu_custom_call.1']
    #allocation6 [shape = 's32[2]{0}', space=sflag, size = 0x8, scoped, tag = 'scoped memory for tpu_custom_call.1']
    #allocation7 [shape = 's32[2]{0}', space=sflag, size = 0x8, scoped, tag = 'scoped memory for tpu_custom_call.1']
    #allocation8 [shape = 'u8[512]{0}', space=smem, size = 0x200, scoped, tag = 'input window, operand 5, single buffered']
    #allocation9 [shape = 'u8[2048]{0}', space=vmem, size = 0x800, scoped, tag = 'output window, operand 0']
    %13 = vsyncpa [#allocation5], 0
    %s14 = scalar_lea.sflag [#allocation5], 1
    %15 = vsyncpa %s14, 0
    %16 = vsyncpa [#allocation7], 0
    %17 = vsyncpa [#allocation6], 0
    %s18 = scalar_lea.sflag [#allocation6], 1
    %19 = vsyncpa %s18, 0
    loop: start=0, step=1, limit=4
    $region2: #{tpu_custom_call.1} parent=1 // loop_pre_header
      _
    $region3: #{tpu_custom_call.1} parent=1 // loop_header
      %s21 = sphi 0, %s25
      %p22 = scmp.ge.s32.totalorder %s21, 4
      %s31 = sphi 0, %s33
      %s34 = sphi 0, %s31
      %s35 = sphi 0, %s34
      %s51 = sphi 0, %s35
      %s55 = sphi 0, %s55
      %s57 = sphi 0, %s55
      %s58 = sphi 0, %s57
      %s72 = sphi 0, %s58
      %s76 = sphi 0, %s76
      %s78 = sphi 0, %s76
      %s79 = sphi 0, %s78
      %s93 = sphi 0, %s79
      %s97 = sphi 0, %s97
      %s99 = sphi 0, %s97
      %s100 = sphi 0, %s99
      %s114 = sphi 0, %s100
      %s118 = sphi 0, %s118
      %s120 = sphi 0, %s118
      %s121 = sphi 0, %s120
      %s135 = sphi 0, %s121
      %s139 = sphi 0, %s139
      %s141 = sphi 0, %s139
      %s142 = sphi 0, %s141
      %s156 = sphi 0, %s142
      %s160 = sphi 0, %s160
      %s162 = sphi 0, %s160
      %s163 = sphi 0, %s162
      %s177 = sphi 0, %s163
      %s183 = sphi 0, %s185
      %s186 = sphi 0, %s183
      %s187 = sphi 0, %s186
      %s203 = sphi 0, %s187
    $region4: #{tpu_custom_call.1} parent=1 // loop_header_branch
      %24 = sbr.rel (%p22) target = $region8
    $region5: #{tpu_custom_call.1} parent=1 // loop_body
      %s26 = ssub.s32 %s21, 1
      %s27 = ssub.s32 %s21, 2
      %s28 = sadd.s32 %s21, 1
      %s29 = ssub.s32 %s21, %s28
      %p30 = scmp.eq.s32.totalorder %s29, 0
      %s32 = sadd.s32 %s31, 1
      %s33 = scalar_select %p30, %s31, %s32
      %p36 = pneg %p30
      %p37 = scmp.eq.s32.totalorder %s21, 1
      %p38 = por %p36, %p37
      %p39 = scmp.ne.s32.totalorder %s31, %s34
      %p40 = scmp.eq.s32.totalorder %s21, 0
      %p41 = por %p39, %p40
      %p42 = scmp.ne.s32.totalorder %s31, %s34
      %p43 = scmp.eq.s32.totalorder %s26, 1
      %p44 = por %p42, %p43
      %p45 = scmp.ne.s32.totalorder %s34, %s35
      %p46 = scmp.eq.s32.totalorder %s26, 0
      %p47 = por %p45, %p46
      %p48 = scmp.ne.s32.totalorder %s34, %s35
      %p49 = scmp.eq.s32.totalorder %s27, 1
      %p50 = por %p48, %p49
      %p52 = scmp.ne.s32.totalorder %s35, %s51
      %p53 = scmp.eq.s32.totalorder %s27, 0
      %p54 = por %p52, %p53
      %s56 = sadd.s32 %s55, 1
      %p59 = scmp.eq.s32.totalorder %s21, 1
      %p60 = scmp.ne.s32.totalorder %s55, %s57
      %p61 = scmp.eq.s32.totalorder %s21, 0
      %p62 = por %p60, %p61
      %p63 = scmp.ne.s32.totalorder %s55, %s57
      %p64 = scmp.eq.s32.totalorder %s26, 1
      %p65 = por %p63, %p64
      %p66 = scmp.ne.s32.totalorder %s57, %s58
      %p67 = scmp.eq.s32.totalorder %s26, 0
      %p68 = por %p66, %p67
      %p69 = scmp.ne.s32.totalorder %s57, %s58
      %p70 = scmp.eq.s32.totalorder %s27, 1
      %p71 = por %p69, %p70
      %p73 = scmp.ne.s32.totalorder %s58, %s72
      %p74 = scmp.eq.s32.totalorder %s27, 0
      %p75 = por %p73, %p74
      %s77 = sadd.s32 %s76, 1
      %p80 = scmp.eq.s32.totalorder %s21, 1
      %p81 = scmp.ne.s32.totalorder %s76, %s78
      %p82 = scmp.eq.s32.totalorder %s21, 0
      %p83 = por %p81, %p82
      %p84 = scmp.ne.s32.totalorder %s76, %s78
      %p85 = scmp.eq.s32.totalorder %s26, 1
      %p86 = por %p84, %p85
      %p87 = scmp.ne.s32.totalorder %s78, %s79
      %p88 = scmp.eq.s32.totalorder %s26, 0
      %p89 = por %p87, %p88
      %p90 = scmp.ne.s32.totalorder %s78, %s79
      %p91 = scmp.eq.s32.totalorder %s27, 1
      %p92 = por %p90, %p91
      %p94 = scmp.ne.s32.totalorder %s79, %s93
      %p95 = scmp.eq.s32.totalorder %s27, 0
      %p96 = por %p94, %p95
      %s98 = sadd.s32 %s97, 1
      %p101 = scmp.eq.s32.totalorder %s21, 1
      %p102 = scmp.ne.s32.totalorder %s97, %s99
      %p103 = scmp.eq.s32.totalorder %s21, 0
      %p104 = por %p102, %p103
      %p105 = scmp.ne.s32.totalorder %s97, %s99
      %p106 = scmp.eq.s32.totalorder %s26, 1
      %p107 = por %p105, %p106
      %p108 = scmp.ne.s32.totalorder %s99, %s100
      %p109 = scmp.eq.s32.totalorder %s26, 0
      %p110 = por %p108, %p109
      %p111 = scmp.ne.s32.totalorder %s99, %s100
      %p112 = scmp.eq.s32.totalorder %s27, 1
      %p113 = por %p111, %p112
      %p115 = scmp.ne.s32.totalorder %s100, %s114
      %p116 = scmp.eq.s32.totalorder %s27, 0
      %p117 = por %p115, %p116
      %s119 = sadd.s32 %s118, 1
      %p122 = scmp.eq.s32.totalorder %s21, 1
      %p123 = scmp.ne.s32.totalorder %s118, %s120
      %p124 = scmp.eq.s32.totalorder %s21, 0
      %p125 = por %p123, %p124
      %p126 = scmp.ne.s32.totalorder %s118, %s120
      %p127 = scmp.eq.s32.totalorder %s26, 1
      %p128 = por %p126, %p127
      %p129 = scmp.ne.s32.totalorder %s120, %s121
      %p130 = scmp.eq.s32.totalorder %s26, 0
      %p131 = por %p129, %p130
      %p132 = scmp.ne.s32.totalorder %s120, %s121
      %p133 = scmp.eq.s32.totalorder %s27, 1
      %p134 = por %p132, %p133
      %p136 = scmp.ne.s32.totalorder %s121, %s135
      %p137 = scmp.eq.s32.totalorder %s27, 0
      %p138 = por %p136, %p137
      %s140 = sadd.s32 %s139, 1
      %p143 = scmp.eq.s32.totalorder %s21, 1
      %p144 = scmp.ne.s32.totalorder %s139, %s141
      %p145 = scmp.eq.s32.totalorder %s21, 0
      %p146 = por %p144, %p145
      %p147 = scmp.ne.s32.totalorder %s139, %s141
      %p148 = scmp.eq.s32.totalorder %s26, 1
      %p149 = por %p147, %p148
      %p150 = scmp.ne.s32.totalorder %s141, %s142
      %p151 = scmp.eq.s32.totalorder %s26, 0
      %p152 = por %p150, %p151
      %p153 = scmp.ne.s32.totalorder %s141, %s142
      %p154 = scmp.eq.s32.totalorder %s27, 1
      %p155 = por %p153, %p154
      %p157 = scmp.ne.s32.totalorder %s142, %s156
      %p158 = scmp.eq.s32.totalorder %s27, 0
      %p159 = por %p157, %p158
      %s161 = sadd.s32 %s160, 1
      %p164 = scmp.eq.s32.totalorder %s21, 1
      %p165 = scmp.ne.s32.totalorder %s160, %s162
      %p166 = scmp.eq.s32.totalorder %s21, 0
      %p167 = por %p165, %p166
      %p168 = scmp.ne.s32.totalorder %s160, %s162
      %p169 = scmp.eq.s32.totalorder %s26, 1
      %p170 = por %p168, %p169
      %p171 = scmp.ne.s32.totalorder %s162, %s163
      %p172 = scmp.eq.s32.totalorder %s26, 0
      %p173 = por %p171, %p172
      %p174 = scmp.ne.s32.totalorder %s162, %s163
      %p175 = scmp.eq.s32.totalorder %s27, 1
      %p176 = por %p174, %p175
      %p178 = scmp.ne.s32.totalorder %s163, %s177
      %p179 = scmp.eq.s32.totalorder %s27, 0
      %p180 = por %p178, %p179
      %s181 = ssub.s32 %s21, %s28
      %p182 = scmp.eq.s32.totalorder %s181, 0
      %s184 = sadd.s32 %s183, 1
      %s185 = scalar_select %p182, %s183, %s184
      %p188 = pneg %p182
      %p189 = scmp.eq.s32.totalorder %s21, 1
      %p190 = por %p188, %p189
      %p191 = scmp.ne.s32.totalorder %s183, %s186
      %p192 = scmp.eq.s32.totalorder %s21, 0
      %p193 = por %p191, %p192
      %p194 = scmp.ne.s32.totalorder %s183, %s186
      %p195 = scmp.eq.s32.totalorder %s26, 1
      %p196 = por %p194, %p195
      %p197 = scmp.ne.s32.totalorder %s186, %s187
      %p198 = scmp.eq.s32.totalorder %s26, 0
      %p199 = por %p197, %p198
      %p200 = scmp.ne.s32.totalorder %s186, %s187
      %p201 = scmp.eq.s32.totalorder %s27, 1
      %p202 = por %p200, %p201
      %p204 = scmp.ne.s32.totalorder %s187, %s203
      %p205 = scmp.eq.s32.totalorder %s27, 0
      %p206 = por %p204, %p205
      %p207 = scmp.le.s32.totalorder 1, %s21
      %p208 = scmp.lt.s32.totalorder %s21, 3
      %p209 = pnand %p207, %p208
      %p210 = pneg %p209
      // Predicated region
      $region9: #{tpu_custom_call.1} parent=5 // pred_check
        _
      $region10: #{tpu_custom_call.1} parent=5 // pred_check_branch
        %212 = sbr.rel (%p209) target = $region12
      $region11: #{tpu_custom_call.1} parent=5 // pred_region
        %s213 = ssub.s32 %s21, 1
        // Predicated region
        $region13: #{tpu_custom_call.1} parent=11 // pred_check
          %p214 = pneg %p68
        $region14: #{tpu_custom_call.1} parent=11 // pred_check_branch
          %216 = sbr.rel (%p214) target = $region16
        $region15: #{tpu_custom_call.1} parent=11 // pred_region
          _
        $region16: #{tpu_custom_call.1} parent=11 // pred_fallthru
          _
        // Predicated region
        $region17: #{tpu_custom_call.1} parent=11 // pred_check
          %p217 = pneg %p89
        $region18: #{tpu_custom_call.1} parent=11 // pred_check_branch
          %219 = sbr.rel (%p217) target = $region20
        $region19: #{tpu_custom_call.1} parent=11 // pred_region
          _
        $region20: #{tpu_custom_call.1} parent=11 // pred_fallthru
          _
        // Predicated region
        $region21: #{tpu_custom_call.1} parent=11 // pred_check
          %p220 = pneg %p110
        $region22: #{tpu_custom_call.1} parent=11 // pred_check_branch
          %222 = sbr.rel (%p220) target = $region24
        $region23: #{tpu_custom_call.1} parent=11 // pred_region
          _
        $region24: #{tpu_custom_call.1} parent=11 // pred_fallthru
          _
        // Predicated region
        $region25: #{tpu_custom_call.1} parent=11 // pred_check
          %p223 = pneg %p131
        $region26: #{tpu_custom_call.1} parent=11 // pred_check_branch
          %225 = sbr.rel (%p223) target = $region28
        $region27: #{tpu_custom_call.1} parent=11 // pred_region
          _
        $region28: #{tpu_custom_call.1} parent=11 // pred_fallthru
          _
        // Predicated region
        $region29: #{tpu_custom_call.1} parent=11 // pred_check
          %p226 = pneg %p152
        $region30: #{tpu_custom_call.1} parent=11 // pred_check_branch
          %228 = sbr.rel (%p226) target = $region32
        $region31: #{tpu_custom_call.1} parent=11 // pred_region
          %s230 = ssub.s32 16, 16
          %231 = vsyncadd [#allocation7], %s230
          %s233 = sshll.u32 %s5, 4
          %s234 = int_to_ptr.vmem [resolvable:$true] %s233
          %236 = dma.vmem_to_smem %s234, 16, [#allocation8], [#allocation7]
        $region32: #{tpu_custom_call.1} parent=11 // pred_fallthru
          _
        // Predicated region
        $region33: #{tpu_custom_call.1} parent=11 // pred_check
          %p237 = pneg %p173
        $region34: #{tpu_custom_call.1} parent=11 // pred_check_branch
          %239 = sbr.rel (%p237) target = $region36
        $region35: #{tpu_custom_call.1} parent=11 // pred_region
          _
        $region36: #{tpu_custom_call.1} parent=11 // pred_fallthru
          _
      $region12: #{tpu_custom_call.1} parent=5 // pred_fallthru
        _
      %p240 = scmp.lt.s32.totalorder %s21, 2
      // Predicated region
      $region37: #{tpu_custom_call.1} parent=5 // pred_check
        %p241 = pneg %p240
      $region38: #{tpu_custom_call.1} parent=5 // pred_check_branch
        %243 = sbr.rel (%p241) target = $region40
      $region39: #{tpu_custom_call.1} parent=5 // pred_region
        // Predicated region
        $region41: #{tpu_custom_call.1} parent=39 // pred_check
          %p244 = pneg %p41
        $region42: #{tpu_custom_call.1} parent=39 // pred_check_branch
          %246 = sbr.rel (%p244) target = $region44
        $region43: #{tpu_custom_call.1} parent=39 // pred_region
          %s247 = sand.u32 %s31, 1
          %s248 = scalar_lea.sflag [#allocation5], %s247
          %s249 = sand.u32 %s31, 1
          %s250 = smul.addr %s249, 64
          %s251 = scalar_lea.vmem [#allocation4], %s250
          %s253 = ssub.s32 1024, 1024
          %254 = vsyncadd %s248, %s253
          %s255 = smul.addr %s21, 8
          %s256 = smul.addr %s255, 128
          %s257 = scalar_lea.hbm %s0, %s256
          %s258 = sshll.u32 %s251, 4
          %s259 = int_to_ptr.vmem [resolvable:$true] %s258
          %264 = dma.hbm_to_vmem [thread:$0]  %s257, 1024, %s259, %s248, 256, 256, 16
        $region44: #{tpu_custom_call.1} parent=39 // pred_fallthru
          _
      $region40: #{tpu_custom_call.1} parent=5 // pred_fallthru
        _
      %p265 = scmp.le.s32.totalorder 1, %s21
      %p266 = scmp.lt.s32.totalorder %s21, 3
      %p267 = pnand %p265, %p266
      %p268 = pneg %p267
      // Predicated region
      $region45: #{tpu_custom_call.1} parent=5 // pred_check
        _
      $region46: #{tpu_custom_call.1} parent=5 // pred_check_branch
        %270 = sbr.rel (%p267) target = $region48
      $region47: #{tpu_custom_call.1} parent=5 // pred_region
        %s271 = ssub.s32 %s21, 1
        %s272 = sand.u32 %s34, 1
        %s273 = scalar_lea.sflag [#allocation5], %s272
        %s274 = sand.u32 %s34, 1
        %s275 = smul.addr %s274, 64
        %s276 = scalar_lea.vmem [#allocation4], %s275
        // Predicated region
        $region49: #{tpu_custom_call.1} parent=47 // pred_check
          %p277 = pneg %p47
        $region50: #{tpu_custom_call.1} parent=47 // pred_check_branch
          %279 = sbr.rel (%p277) target = $region52
        $region51: #{tpu_custom_call.1} parent=47 // pred_region
          %280 = dma.done %s273, 1024
        $region52: #{tpu_custom_call.1} parent=47 // pred_fallthru
          _
        // Predicated region
        $region53: #{tpu_custom_call.1} parent=47 // pred_check
          %p281 = pneg %p152
        $region54: #{tpu_custom_call.1} parent=47 // pred_check_branch
          %283 = sbr.rel (%p281) target = $region56
        $region55: #{tpu_custom_call.1} parent=47 // pred_region
          %284 = dma.done [#allocation7], 16
        $region56: #{tpu_custom_call.1} parent=47 // pred_fallthru
          _
        %285 = sfence
        %s286 = sand.u32 %s34, 1
        %s287 = scalar_lea.sflag [#allocation5], %s286
        %s288 = sand.u32 %s34, 1
        %s289 = smul.addr %s288, 64
        %s290 = scalar_lea.vmem [#allocation4], %s289
        %p291 = pneg %p47
        %p292 = pneg %p44
        %p293 = pneg %p68
        %p294 = pneg %p65
        %p295 = pneg %p89
        %p296 = pneg %p86
        %p297 = pneg %p110
        %p298 = pneg %p107
        %p299 = pneg %p131
        %p300 = pneg %p128
        %p301 = pneg %p152
        %p302 = pneg %p149
        %p303 = pneg %p173
        %p304 = pneg %p170
        %p305 = pneg %p199
        %p306 = pneg %p196
        %s307 = sand.u32 %s186, 1
        %s308 = scalar_lea.sflag [#allocation6], %s307
        %s309 = sand.u32 %s186, 1
        %s310 = smul.addr %s309, 2
        %s311 = scalar_lea.vmem [#allocation9], %s310
        %v312 = vld [vmem:[%s276] sm:$0xff]
        %v313 = vld [vmem:[%s276 + $0x8] sm:$0xff]
        %v314 = vld [vmem:[%s276 + $0x10] sm:$0xff]
        %v315 = vld [vmem:[%s276 + $0x18] sm:$0xff]
        %v316 = vld [vmem:[%s276 + $0x20] sm:$0xff]
        %v317 = vld [vmem:[%s276 + $0x28] sm:$0xff]
        %v318 = vld [vmem:[%s276 + $0x30] sm:$0xff]
        %v319 = vld [vmem:[%s276 + $0x38] sm:$0xff]
        %v320 = vmax.f32 %v312, %v313
        %321 = vmax.xlane.f32.xlu0 %v320
        %v322 = vpop.xlane.xlu0 %321
        %v323 = vmax.f32 %v314, %v315
        %324 = vmax.xlane.f32.xlu0 %v323
        %v325 = vpop.xlane.xlu0 %324
        %v326 = vmax.f32 %v316, %v317
        %327 = vmax.xlane.f32.xlu0 %v326
        %v328 = vpop.xlane.xlu0 %327
        %v329 = vmax.f32 %v318, %v319
        %330 = vmax.xlane.f32.xlu0 %v329
        %v331 = vpop.xlane.xlu0 %330
        %v332 = vadd.f32 %v312, %v313
        %333 = vadd.xlane.f32.xlu0 %v332
        %v334 = vpop.xlane.xlu0 %333
        %v335 = vadd.f32 %v314, %v315
        %336 = vadd.xlane.f32.xlu0 %v335
        %v337 = vpop.xlane.xlu0 %336
        %v338 = vadd.f32 %v316, %v317
        %339 = vadd.xlane.f32.xlu0 %v338
        %v340 = vpop.xlane.xlu0 %339
        %v341 = vadd.f32 %v318, %v319
        %342 = vadd.xlane.f32.xlu0 %v341
        %v343 = vpop.xlane.xlu0 %342
        %v344 = vmul.f32 %v334, 0.00390625
        %v345 = vmul.f32 %v337, 0.00390625
        %v346 = vmul.f32 %v340, 0.00390625
        %v347 = vmul.f32 %v343, 0.00390625
        %v352 = vlaneseq
        %v353 = vand.u32 %v352, 127
        %v354 = vlaneseq
        %v355 = vshrl.u32 %v354, 7
        %v356 = vsub.s32 %v353, %v355
        %v357 = vrot.slane %v322, %v356
        %v358 = vadd.s32 %v353, 4294967288
        %v359 = vlaneseq
        %v360 = vshrl.u32 %v359, 7
        %v361 = vsub.s32 %v358, %v360
        %v362 = vrot.slane %v325, %v361
        %vm363 = vcmask 130112
        %v364 = vsel %vm363, %v362, %v357
        %v365 = vadd.s32 %v353, 4294967280
        %v366 = vlaneseq
        %v367 = vshrl.u32 %v366, 7
        %v368 = vsub.s32 %v365, %v367
        %v369 = vrot.slane %v328, %v368
        %vm370 = vcmask 195712
        %v371 = vsel %vm370, %v369, %v364
        %v372 = vadd.s32 %v353, 4294967272
        %v373 = vlaneseq
        %v374 = vshrl.u32 %v373, 7
        %v375 = vsub.s32 %v372, %v374
        %v376 = vrot.slane %v331, %v375
        %vm377 = vcmask 261312
        %v378 = vsel %vm377, %v376, %v371
        %v384 = vlaneseq
        %v385 = vshrl.u32 %v384, 7
        %v386 = vsub.s32 %v353, %v385
        %v387 = vrot.slane %v344, %v386
        %v388 = vlaneseq
        %v389 = vshrl.u32 %v388, 7
        %v390 = vsub.s32 %v358, %v389
        %v391 = vrot.slane %v345, %v390
        %v392 = vsel %vm363, %v391, %v387
        %v393 = vlaneseq
        %v394 = vshrl.u32 %v393, 7
        %v395 = vsub.s32 %v365, %v394
        %v396 = vrot.slane %v346, %v395
        %v397 = vsel %vm370, %v396, %v392
        %v398 = vlaneseq
        %v399 = vshrl.u32 %v398, 7
        %v400 = vsub.s32 %v372, %v399
        %v401 = vrot.slane %v347, %v400
        %v402 = vsel %vm377, %v401, %v397
        %vm404 = vcmask 1040384
        %v405 = vsel %vm404, %v378, %v402
        %v406 = vld [vmem:[%s1] sm:$0xff]
        %v407 = vld [vmem:[%s1 + $0x8] sm:$0xff]
        %v408 = vld [vmem:[%s1 + $0x10] sm:$0xff]
        %v409 = vld [vmem:[%s1 + $0x18] sm:$0xff]
        %v410 = vld [vmem:[%s2] sm:$0x1]
        %v412 = vlaneseq
        %v413 = vshrl.u32 %v412, 7
        %v414 = vsub.s32 0, %v413
        %v415 = vrot.slane %v410, %v414
        %vm417 = vcmask 261120
        %v419 = vsel %vm417, %v405, 0
        %421 = vmatprep.subr.mxu0 0.0
        %422 = vmatpush1.msra.mxu0 %v406
        %423 = vmatprep.subr.mxu0 0.0
        %424 = vmatpush1.msra.mxu0 %v407
        %425 = vmatprep.subr.mxu0 0.0
        %426 = vmatpush1.msra.mxu0 %v408
        %427 = vmatprep.subr.mxu0 0.0
        %428 = vmatpush1.msra.mxu0 %v409
        %429 = vmatprep.subr.mxu0 0.0
        %430 = vmatpush1.msra.mxu0 0.0
        %431 = vmatprep.subr.mxu0 0.0
        %432 = vmatpush1.msra.mxu0 0.0
        %433 = vmatprep.subr.mxu0 0.0
        %434 = vmatpush1.msra.mxu0 0.0
        %435 = vmatprep.subr.mxu0 0.0
        %436 = vmatpush1.msra.mxu0 0.0
        %437 = vmatprep.subr.mxu0 0.0
        %438 = vmatpush1.msra.mxu0 0.0
        %439 = vmatprep.subr.mxu0 0.0
        %440 = vmatpush1.msra.mxu0 0.0
        %441 = vmatprep.subr.mxu0 0.0
        %442 = vmatpush1.msra.mxu0 0.0
        %443 = vmatprep.subr.mxu0 0.0
        %444 = vmatpush1.msra.mxu0 0.0
        %445 = vmatprep.subr.mxu0 0.0
        %446 = vmatpush1.msra.mxu0 0.0
        %447 = vmatprep.subr.mxu0 0.0
        %448 = vmatpush1.msra.mxu0 0.0
        %449 = vmatprep.subr.mxu0 0.0
        %450 = vmatpush1.msra.mxu0 0.0
        %451 = vmatprep.subr.mxu0 0.0
        %452 = vmatpush1.msra.mxu0 0.0
        %453 = vmatprep.subr.mxu0 0.0
        %454 = vmatpush1.msra.mxu0 0.0
        %455 = vmatprep.subr.mxu0 0.0
        %456 = vmatpush1.msra.mxu0 0.0
        %457 = vmatprep.subr.mxu0 0.0
        %458 = vmatpush1.msra.mxu0 0.0
        %459 = vmatprep.subr.mxu0 0.0
        %460 = vmatpush1.msra.mxu0 0.0
        %461 = vmatprep.subr.mxu0 0.0
        %462 = vmatpush1.msra.mxu0 0.0
        %463 = vmatprep.subr.mxu0 0.0
        %464 = vmatpush1.msra.mxu0 0.0
        %465 = vmatprep.subr.mxu0 0.0
        %466 = vmatpush1.msra.mxu0 0.0
        %467 = vmatprep.subr.mxu0 0.0
        %468 = vmatpush1.msra.mxu0 0.0
        %469 = vmatprep.subr.mxu0 0.0
        %470 = vmatpush1.msra.mxu0 0.0
        %471 = vmatprep.subr.mxu0 0.0
        %472 = vmatpush1.msra.mxu0 0.0
        %473 = vmatprep.subr.mxu0 0.0
        %474 = vmatpush1.msra.mxu0 0.0
        %475 = vmatprep.subr.mxu0 0.0
        %476 = vmatpush1.msra.mxu0 0.0
        %477 = vmatprep.subr.mxu0 0.0
        %478 = vmatpush1.msra.mxu0 0.0
        %479 = vmatprep.subr.mxu0 0.0
        %480 = vmatpush1.msra.mxu0 0.0
        %481 = vmatprep.subr.mxu0 0.0
        %482 = vmatpush1.msra.mxu0 0.0
        %483 = vmatprep.subr.mxu0 0.0
        %484 = vmatpush1.msra.mxu0 0.0
        %485 = vmatprep.mubr.f32.mxu0 0.0
        %486 = vmatmul.mubr.f32.gmra.mrb[0].mxu0 %v419
        %v487 = vpop.f32.mrb[0].mxu0
        %v488 = vadd.f32 %v415, %v487
        %v489 = vpop.f32.mrb[0].mxu0
        %490 = vdwg.mxu0
        %v491 = vmax.f32 %v488, 0.0
        %v492 = vld [vmem:[%s3] sm:$0x3]
        %v493 = vld [vmem:[%s4] sm:$0x1]
        %v495 = vlaneseq
        %v496 = vshrl.u32 %v495, 7
        %v497 = vsub.s32 0, %v496
        %v498 = vrot.slane %v493, %v497
        %vm500 = vcmask 15360
        %v502 = vsel %vm500, %v491, 0
        %vm504 = vcmask 1041408
        %v506 = vsel %vm504, %v492, 0
        %508 = vmatprep.subr.mxu0 0.0
        %509 = vmatpush1.msra.mxu0 %v506
        %510 = vmatprep.subr.mxu0 0.0
        %511 = vmatpush1.msra.mxu0 0.0
        %512 = vmatprep.subr.mxu0 0.0
        %513 = vmatpush1.msra.mxu0 0.0
        %514 = vmatprep.subr.mxu0 0.0
        %515 = vmatpush1.msra.mxu0 0.0
        %516 = vmatprep.subr.mxu0 0.0
        %517 = vmatpush1.msra.mxu0 0.0
        %518 = vmatprep.subr.mxu0 0.0
        %519 = vmatpush1.msra.mxu0 0.0
        %520 = vmatprep.subr.mxu0 0.0
        %521 = vmatpush1.msra.mxu0 0.0
        %522 = vmatprep.subr.mxu0 0.0
        %523 = vmatpush1.msra.mxu0 0.0
        %524 = vmatprep.subr.mxu0 0.0
        %525 = vmatpush1.msra.mxu0 0.0
        %526 = vmatprep.subr.mxu0 0.0
        %527 = vmatpush1.msra.mxu0 0.0
        %528 = vmatprep.subr.mxu0 0.0
        %529 = vmatpush1.msra.mxu0 0.0
        %530 = vmatprep.subr.mxu0 0.0
        %531 = vmatpush1.msra.mxu0 0.0
        %532 = vmatprep.subr.mxu0 0.0
        %533 = vmatpush1.msra.mxu0 0.0
        %534 = vmatprep.subr.mxu0 0.0
        %535 = vmatpush1.msra.mxu0 0.0
        %536 = vmatprep.subr.mxu0 0.0
        %537 = vmatpush1.msra.mxu0 0.0
        %538 = vmatprep.subr.mxu0 0.0
        %539 = vmatpush1.msra.mxu0 0.0
        %540 = vmatprep.subr.mxu0 0.0
        %541 = vmatpush1.msra.mxu0 0.0
        %542 = vmatprep.subr.mxu0 0.0
        %543 = vmatpush1.msra.mxu0 0.0
        %544 = vmatprep.subr.mxu0 0.0
        %545 = vmatpush1.msra.mxu0 0.0
        %546 = vmatprep.subr.mxu0 0.0
        %547 = vmatpush1.msra.mxu0 0.0
        %548 = vmatprep.subr.mxu0 0.0
        %549 = vmatpush1.msra.mxu0 0.0
        %550 = vmatprep.subr.mxu0 0.0
        %551 = vmatpush1.msra.mxu0 0.0
        %552 = vmatprep.subr.mxu0 0.0
        %553 = vmatpush1.msra.mxu0 0.0
        %554 = vmatprep.subr.mxu0 0.0
        %555 = vmatpush1.msra.mxu0 0.0
        %556 = vmatprep.subr.mxu0 0.0
        %557 = vmatpush1.msra.mxu0 0.0
        %558 = vmatprep.subr.mxu0 0.0
        %559 = vmatpush1.msra.mxu0 0.0
        %560 = vmatprep.subr.mxu0 0.0
        %561 = vmatpush1.msra.mxu0 0.0
        %562 = vmatprep.subr.mxu0 0.0
        %563 = vmatpush1.msra.mxu0 0.0
        %564 = vmatprep.subr.mxu0 0.0
        %565 = vmatpush1.msra.mxu0 0.0
        %566 = vmatprep.subr.mxu0 0.0
        %567 = vmatpush1.msra.mxu0 0.0
        %568 = vmatprep.subr.mxu0 0.0
        %569 = vmatpush1.msra.mxu0 0.0
        %570 = vmatprep.subr.mxu0 0.0
        %571 = vmatpush1.msra.mxu0 0.0
        %572 = vmatprep.mubr.f32.mxu0 0.0
        %573 = vmatmul.mubr.f32.gmra.mrb[0].mxu0 %v502
        %v574 = vpop.f32.mrb[0].mxu0
        %v575 = vadd.f32 %v498, %v574
        %v576 = vpop.f32.mrb[0].mxu0
        %577 = vdwg.mxu0
        %v579 = vrot.slane %v575, 1
        %v581 = vadd.f32 %v575, %v579
        %v582 = vxor.u32 %v581, 2147483648
        %v583 = vmul.f32 %v582, 1.442695
        %v584 = vpow.pop %v583
        %v585 = vadd.f32 %v584, 1.0
        %v586 = vrcp.pop %v585
        %v587 = vmul.f32 1.0, %v586
        %vm588 = vcmask 253952
        %589 = vst.msk [vmem:[#allocation2] sm:$0x1] %vm588, %v587
        %s590 = smul.u32 0, 2
        %s591 = smul.addr %s590, 8
        %s592 = scalar_lea.vmem %s276, %s591 [#allocation4]
        %v593 = vld [vmem:[%s592] sm:$0xff]
        %v594 = vld [vmem:[%s592 + $0x8] sm:$0xff]
        %v595 = vld [vmem:[%s592 + $0x10] sm:$0xff]
        %v596 = vld [vmem:[%s592 + $0x18] sm:$0xff]
        %v597 = vld [vmem:[%s592 + $0x20] sm:$0xff]
        %v598 = vld [vmem:[%s592 + $0x28] sm:$0xff]
        %v599 = vld [vmem:[%s592 + $0x30] sm:$0xff]
        %v600 = vld [vmem:[%s592 + $0x38] sm:$0xff]
        %v601 = vld [vmem:[#allocation2] sm:$0x1]
        %v602 = vlaneseq
        %v603 = vshrl.u32 %v602, 7
        %v604 = vsub.s32 0, %v603
        %v605 = vrot.slane %v601, %v604
        %607 = vbcast.lane.b32.xlu0 %v605, 256
        %v608 = vpop.permute.xlu0 %607
        %s610 = sor.u32 256, 8
        %611 = vbcast.lane.b32.xlu0 %v605, %s610
        %v612 = vpop.permute.xlu0 %611
        %s614 = sor.u32 256, 16
        %615 = vbcast.lane.b32.xlu0 %v605, %s614
        %v616 = vpop.permute.xlu0 %615
        %s618 = sor.u32 256, 24
        %619 = vbcast.lane.b32.xlu0 %v605, %s618
        %v620 = vpop.permute.xlu0 %619
        %v621 = vmul.f32 %v593, %v608
        %v622 = vmul.f32 %v594, %v608
        %v623 = vmul.f32 %v595, %v612
        %v624 = vmul.f32 %v596, %v612
        %v625 = vmul.f32 %v597, %v616
        %v626 = vmul.f32 %v598, %v616
        %v627 = vmul.f32 %v599, %v620
        %v628 = vmul.f32 %v600, %v620
        %v629 = vmax.f32 %v621, %v625
        %v630 = vmax.f32 %v623, %v627
        %v631 = vmax.f32 %v629, %v630
        %v632 = vrot.slane %v631, 4
        %v633 = vmax.f32 %v631, %v632
        %v634 = vrot.slane %v633, 2
        %v635 = vmax.f32 %v633, %v634
        %v636 = vrot.slane %v635, 1
        %v637 = vmax.f32 %v635, %v636
        %v638 = vmax.f32 %v622, %v626
        %v639 = vmax.f32 %v624, %v628
        %v640 = vmax.f32 %v638, %v639
        %v641 = vrot.slane %v640, 4
        %v642 = vmax.f32 %v640, %v641
        %v643 = vrot.slane %v642, 2
        %v644 = vmax.f32 %v642, %v643
        %v645 = vrot.slane %v644, 1
        %v646 = vmax.f32 %v644, %v645
        %v647 = vadd.f32 %v621, %v623
        %v648 = vadd.f32 %v647, %v625
        %v649 = vadd.f32 %v648, %v627
        %v650 = vrot.slane %v649, 4
        %v651 = vadd.f32 %v649, %v650
        %v652 = vrot.slane %v651, 2
        %v653 = vadd.f32 %v651, %v652
        %v654 = vrot.slane %v653, 1
        %v655 = vadd.f32 %v653, %v654
        %v656 = vadd.f32 %v622, %v624
        %v657 = vadd.f32 %v656, %v626
        %v658 = vadd.f32 %v657, %v628
        %v659 = vrot.slane %v658, 4
        %v660 = vadd.f32 %v658, %v659
        %v661 = vrot.slane %v660, 2
        %v662 = vadd.f32 %v660, %v661
        %v663 = vrot.slane %v662, 1
        %v664 = vadd.f32 %v662, %v663
        %v665 = vadd.f32 %v655, 0.0
        %v666 = vadd.f32 %v664, 0.0
        %s667 = sld [smem:[#allocation8]]
        %v668 = vstv %s667
        %v669 = vmul.f32 %v668, %v637
        %v670 = vmul.f32 %v668, %v646
        %s671 = sld [smem:[#allocation8 + $0x1]]
        %v672 = vmul.f32 %v665, 0.03125
        %v673 = vmul.f32 %v666, 0.03125
        %v674 = vstv %s671
        %v675 = vmul.f32 %v674, %v672
        %v676 = vmul.f32 %v674, %v673
        %v677 = vadd.f32 %v669, %v675
        %v678 = vadd.f32 %v670, %v676
        %s679 = sld [smem:[#allocation3]]
        %v680 = vstv %s679
        %v681 = vadd.f32 %v677, %v680
        %v682 = vadd.f32 %v678, %v680
        %v683 = vxor.u32 %v681, 2147483648
        %v684 = vxor.u32 %v682, 2147483648
        %v685 = vmul.f32 %v683, 1.442695
        %v686 = vpow.pop %v685
        %v687 = vmul.f32 %v684, 1.442695
        %v688 = vpow.pop %v687
        %v689 = vadd.f32 %v686, 1.0
        %v690 = vadd.f32 %v688, 1.0
        %v691 = vrcp.pop %v689
        %v692 = vmul.f32 1.0, %v691
        %v693 = vrcp.pop %v690
        %v694 = vmul.f32 1.0, %v693
        %v697 = vcombine.low %v692, %v694
        %v699 = vunpack.c.l.s4 1966171168
        %v700 = vunpack.c.0.s8 %v699
        %v701 = vlaneseq
        %v702 = vshrl.u32 %v701, 7
        %v703 = vsub.s32 %v700, %v702
        %v704 = vrot.slane %v697, %v703
        %v706 = vunpack.c.l.s4 1966171168
        %v707 = vunpack.c.0.s8 %v706
        %v708 = vlaneseq
        %v709 = vshrl.u32 %v708, 7
        %v710 = vsub.s32 %v707, %v709
        %v711 = vrot.slane %v704, %v710
        %v713 = vlaneseq
        %vm714 = vcmp.ge.s32.totalorder %v713, 0
        %vm715 = vcmp.lt.s32.totalorder %v713, 256
        %vm716 = vmand %vm714, %vm715
        %717 = vst.msk [vmem:[%s311] sm:$0x3] %vm716, %v711
        %s718 = sand.u32 %s186, 1
        %s719 = scalar_lea.sflag [#allocation6], %s718
        %s720 = sand.u32 %s186, 1
        %s721 = smul.addr %s720, 2
        %s722 = scalar_lea.vmem [#allocation9], %s721
        // Predicated region
        $region57: #{tpu_custom_call.1} parent=47 // pred_check
          %p723 = pneg %p196
        $region58: #{tpu_custom_call.1} parent=47 // pred_check_branch
          %725 = sbr.rel (%p723) target = $region60
        $region59: #{tpu_custom_call.1} parent=47 // pred_region
          %s727 = ssub.s32 32, 32
          %728 = vsyncadd %s719, %s727
          %s729 = smul.addr %s26, 2
          %s730 = smul.addr %s729, 16
          %s731 = scalar_lea.hbm %s7, %s730
          %s733 = sshll.u32 %s722, 4
          %s734 = int_to_ptr.vmem [resolvable:$true] %s733
          %736 = dma.vmem_to_hbm [thread:$0]  %s734, 32, %s731, %s719
        $region60: #{tpu_custom_call.1} parent=47 // pred_fallthru
          _
      $region48: #{tpu_custom_call.1} parent=5 // pred_fallthru
        _
      %p737 = scmp.le.s32.totalorder 2, %s21
      // Predicated region
      $region61: #{tpu_custom_call.1} parent=5 // pred_check
        %p738 = pneg %p737
      $region62: #{tpu_custom_call.1} parent=5 // pred_check_branch
        %740 = sbr.rel (%p738) target = $region64
      $region63: #{tpu_custom_call.1} parent=5 // pred_region
        %s741 = ssub.s32 %s21, 2
        // Predicated region
        $region65: #{tpu_custom_call.1} parent=63 // pred_check
          %p742 = pneg %p202
        $region66: #{tpu_custom_call.1} parent=63 // pred_check_branch
          %744 = sbr.rel (%p742) target = $region68
        $region67: #{tpu_custom_call.1} parent=63 // pred_region
          %s745 = sand.u32 %s187, 1
          %s746 = scalar_lea.sflag [#allocation6], %s745
          %s747 = sand.u32 %s187, 1
          %s748 = smul.addr %s747, 2
          %s749 = scalar_lea.vmem [#allocation9], %s748
          %750 = dma.done %s746, 32
        $region68: #{tpu_custom_call.1} parent=63 // pred_fallthru
          _
      $region64: #{tpu_custom_call.1} parent=5 // pred_fallthru
        _
    $region6: #{tpu_custom_call.1} parent=1 // loop_footer
      %s25 = sadd.s32 1, %s21
    $region7: #{tpu_custom_call.1} parent=1 // loop_footer_branch
      %20 = sbr.rel target = $region3
    $region8: #{tpu_custom_call.1} parent=1 // loop_exit
      _
    %751 = vsyncpa [#allocation5], 1
    %s752 = scalar_lea.sflag [#allocation5], 1
    %753 = vsyncpa %s752, 1
    %754 = vsyncpa [#allocation6], 1
    %s755 = scalar_lea.sflag [#allocation6], 1
    %756 = vsyncpa %s755, 1
    %757 = vsyncpa [#allocation7], 1
    %s758 = scalar_lea.sflag [#allocation7], 1
    %759 = vsyncpa %s758, 1

</llo_original>
